<compile_context>
chip_gen: v7x
topology: tpu7x:2x2x1
jax: 0.10.0
libtpu: 0.0.40
codegen_flags: <defaults>
</compile_context>

<pallas_src>
import functools

import jax
import jax.numpy as jnp
from jax import lax
from jax.experimental import pallas as pl
from jax.experimental.pallas import tpu as pltpu

TM_MAX = 256   # row-blocks of 128 boxes per grid step -> up to 32768 boxes / step / core


def _num_tensorcores_per_chip() -> int:
    """How many TensorCores one Pallas program can shard a 'parallel' axis across."""
    try:
        kind = jax.devices()[0].device_kind.lower()
    except Exception:  # pragma: no cover - defensive
        return 1
    # Megacore generations (2 TensorCores behind one device): v7x, v4, v3.
    if "v7" in kind or "7x" in kind or "v4" in kind or "v3" in kind:
        return 2
    # v5e / v5p-as-1TC / v6e: a 2-way split is pure overhead.
    return 1


def _iou_loss_diou_kernel(data_ref, out_ref, *, n, var0, var1):
    """One (TM, 128) tile of boxes per grid step.

    data_ref : (3, 4, TM, 128)   [0]=loc_p offsets, [1]=loc_t corners, [2]=priors (cx,cy,w,h)
    out_ref  : (1, TM, 128) f32  per-lane partial sums of (1 - diou), resident per core
    n        : static Python int, true number of boxes (tail masking)
    """
    i = pl.program_id(0)
    j = pl.program_id(1)
    tm = out_ref.shape[1]

    # Reset this core's per-lane accumulator at the start of its row range.
    @pl.when(j == 0)
    def _():
        out_ref[...] = jnp.zeros_like(out_ref)

    f32 = jnp.float32
    # (astype is a no-op when inputs are already f32.)
    # Predicted encoded offsets.
    dx = data_ref[0, 0].astype(f32)
    dy = data_ref[0, 1].astype(f32)
    dw = data_ref[0, 2].astype(f32)
    dh = data_ref[0, 3].astype(f32)
    # Target boxes (corner form).
    tx1 = data_ref[1, 0].astype(f32)
    ty1 = data_ref[1, 1].astype(f32)
    tx2 = data_ref[1, 2].astype(f32)
    ty2 = data_ref[1, 3].astype(f32)
    # Priors (center form).
    pcx = data_ref[2, 0].astype(f32)
    pcy = data_ref[2, 1].astype(f32)
    pw = data_ref[2, 2].astype(f32)
    ph = data_ref[2, 3].astype(f32)

    # ---- decode (pred_mode == 'Center'); cx/cy/w/h reused below for DIoU ----
    cx1 = pcx + dx * var0 * pw
    cy1 = pcy + dy * var0 * ph
    w1 = pw * jnp.exp(dw * var1)
    h1 = ph * jnp.exp(dh * var1)
    x1 = cx1 - 0.5 * w1
    y1 = cy1 - 0.5 * h1
    x2 = x1 + w1
    y2 = y1 + h1

    # ---- paired DIoU ----
    w2 = tx2 - tx1
    h2 = ty2 - ty1
    area1 = w1 * h1
    area2 = w2 * h2
    cx2 = 0.5 * (tx1 + tx2)
    cy2 = 0.5 * (ty1 + ty2)

    inter_w = jnp.maximum(jnp.minimum(x2, tx2) - jnp.maximum(x1, tx1), 0.0)
    inter_h = jnp.maximum(jnp.minimum(y2, ty2) - jnp.maximum(y1, ty1), 0.0)
    inter = inter_w * inter_h

    c_w = jnp.maximum(jnp.maximum(x2, tx2) - jnp.minimum(x1, tx1), 0.0)
    c_h = jnp.maximum(jnp.maximum(y2, ty2) - jnp.minimum(y1, ty1), 0.0)

    inter_diag = (cx2 - cx1) ** 2 + (cy2 - cy1) ** 2
    c_diag = c_w * c_w + c_h * c_h

    union = area1 + area2 - inter
    # EUP approximate reciprocals instead of VALU divides (separate issue slot).
    dious = inter * pl.reciprocal(union, approx=True) \
        - inter_diag * pl.reciprocal(c_diag, approx=True)
    dious = jnp.clip(dious, -1.0, 1.0)
    contrib = 1.0 - dious                                  # (tm, 128)

    # Static tail gating: full blocks take the cheap path; only the block(s) that
    # contain padded lanes build the iota/compare/select mask (padded lanes produce
    # NaN from reciprocal-of-zero; the select drops them).
    block = i * pl.num_programs(1) + j
    base = block * (tm * 128)
    is_full = base + tm * 128 <= n

    @pl.when(is_full)
    def _():
        out_ref[...] += contrib[None, :, :]

    @pl.when(jnp.logical_not(is_full))
    def _():
        row = lax.broadcasted_iota(jnp.int32, (tm, 128), 0)
        lane = lax.broadcasted_iota(jnp.int32, (tm, 128), 1)
        valid = (base + row * 128 + lane) < n
        out_ref[...] += jnp.where(valid, contrib, 0.0)[None, :, :]


def iou_loss_diou(loc_p, loc_t, prior_data, variances=(0.1, 0.2), *, tm_max=TM_MAX):
    """Pallas implementation of IouLoss(pred_mode='Center', losstype='Diou')."""
    n = loc_p.shape[0]
    if n == 0:
        return jnp.zeros((), jnp.float32)

    # Keep the (possibly narrow, e.g. bf16) input dtype through HBM; widen in-kernel.
    dtype = jnp.result_type(loc_p.dtype, loc_t.dtype, prior_data.dtype)
    sub = 32 // jnp.dtype(dtype).itemsize          # sublane tile: 8 f32, 16 bf16, 32 int8/fp8
    tm_cap = max(sub, (int(tm_max) // sub) * sub)  # keep tm a multiple of the sublane tile

    rows = pl.cdiv(n, 128)                         # rows of 128 boxes
    nc = _num_tensorcores_per_chip()
    nc = max(1, min(nc, rows // sub))              # don't split tiny problems across cores
    rows_per_core = pl.cdiv(rows, nc)
    tm = min(tm_cap, pl.cdiv(rows_per_core, sub) * sub)
    jb = pl.cdiv(rows, nc * tm)                    # row-blocks per core
    rows_pad = nc * jb * tm
    n_pad = rows_pad * 128

    # Single fused relayout: (3, N, 4) -> zero-padded -> (3, 4, rows_pad, 128) so every
    # per-coordinate operand in the kernel is a full lane-dense (tm, 128) vreg tile and
    # all three tensors arrive through ONE BlockSpec / one DMA stream per grid step.
    # TODO(synk): persist this packed layout at the producer of loc_p/loc_t/priors to
    # remove the extra HBM read+write of this relayout (kernel needs only 48 B/box).
    stacked = jnp.stack([jnp.asarray(loc_p, dtype),
                         jnp.asarray(loc_t, dtype),
                         jnp.asarray(prior_data, dtype)], axis=0)          # (3, n, 4)
    stacked = jnp.pad(stacked, ((0, 0), (0, n_pad - n), (0, 0)))           # masked in-kernel
    data = stacked.transpose(0, 2, 1).reshape(3, 4, rows_pad, 128)

    kernel = functools.partial(
        _iou_loss_diou_kernel, n=int(n),
        var0=float(variances[0]), var1=float(variances[1]))

    partials = pl.pallas_call(
        kernel,
        out_shape=jax.ShapeDtypeStruct((nc, tm, 128), jnp.float32),
        grid_spec=pltpu.PrefetchScalarGridSpec(
            num_scalar_prefetch=0,
            grid=(nc, jb),
            in_specs=[
                pl.BlockSpec((3, 4, tm, 128), lambda i, j: (0, 0, i * jb + j, 0)),
            ],
            out_specs=pl.BlockSpec((1, tm, 128), lambda i, j: (i, 0, 0)),
        ),
        compiler_params=pltpu.CompilerParams(
            dimension_semantics=("parallel", "arbitrary")),
    )(data)

    # Tiny epilogue: cross-lane reduction of per-core per-lane partials.
    return jnp.sum(partials)


def _reference(loc_p, loc_t, priors, variances=(0.1, 0.2)):
    """Pure-JAX reference mirroring the PyTorch decode + bbox_overlaps_diou."""
    v0, v1 = variances
    cxcy = priors[:, :2] + loc_p[:, :2] * v0 * priors[:, 2:]
    wh = priors[:, 2:] * jnp.exp(loc_p[:, 2:] * v1)
    x1y1 = cxcy - wh / 2.0
    x2y2 = x1y1 + wh
    b1 = jnp.concatenate([x1y1, x2y2], axis=1)
    b2 = loc_t

    w1 = b1[:, 2] - b1[:, 0]
    h1 = b1[:, 3] - b1[:, 1]
    w2 = b2[:, 2] - b2[:, 0]
    h2 = b2[:, 3] - b2[:, 1]
    area1, area2 = w1 * h1, w2 * h2
    cx1, cy1 = (b1[:, 2] + b1[:, 0]) / 2, (b1[:, 3] + b1[:, 1]) / 2
    cx2, cy2 = (b2[:, 2] + b2[:, 0]) / 2, (b2[:, 3] + b2[:, 1]) / 2
    inter = jnp.maximum(jnp.minimum(b1[:, 2], b2[:, 2]) - jnp.maximum(b1[:, 0], b2[:, 0]), 0.0) * \
            jnp.maximum(jnp.minimum(b1[:, 3], b2[:, 3]) - jnp.maximum(b1[:, 1], b2[:, 1]), 0.0)
    c_w = jnp.maximum(jnp.maximum(b1[:, 2], b2[:, 2]) - jnp.minimum(b1[:, 0], b2[:, 0]), 0.0)
    c_h = jnp.maximum(jnp.maximum(b1[:, 3], b2[:, 3]) - jnp.minimum(b1[:, 1], b2[:, 1]), 0.0)
    inter_diag = (cx2 - cx1) ** 2 + (cy2 - cy1) ** 2
    c_diag = c_w ** 2 + c_h ** 2
    union = area1 + area2 - inter
    dious = jnp.clip(inter / union - inter_diag / c_diag, -1.0, 1.0)
    return jnp.sum(1.0 - dious)


def _make_inputs(n, key):
    ka, kb, kc, kd = jax.random.split(key, 4)
    # Predicted encoded offsets (like network output for matched priors).
    loc_p = jax.random.normal(ka, (n, 4), jnp.float32) * 0.5
    # Priors in center form (cx, cy, w, h).
    pr_cxcy = jax.random.uniform(kb, (n, 2), jnp.float32, minval=0.2, maxval=0.8)
    pr_wh = jax.random.uniform(kc, (n, 2), jnp.float32, minval=0.05, maxval=0.3)
    prior_data = jnp.concatenate([pr_cxcy, pr_wh], axis=1)
    # Ground-truth boxes in corner form (x1, y1, x2, y2).
    gt_cxcy = jax.random.uniform(kd, (n, 2), jnp.float32, minval=0.2, maxval=0.8)
    gt_wh = jax.random.uniform(jax.random.fold_in(kd, 1), (n, 2), jnp.float32,
                               minval=0.05, maxval=0.3)
    loc_t = jnp.concatenate([gt_cxcy - gt_wh / 2, gt_cxcy + gt_wh / 2], axis=1)
    return loc_p, loc_t, prior_data


if __name__ == "__main__":
    key = jax.random.PRNGKey(0)
    k1, k2 = jax.random.split(key, 2)

    # Case 1: small N (not a multiple of 128) — exercises the masked tail block.
    lp, lt, pr = _make_inputs(200, k1)
    loss = jax.block_until_ready(jax.jit(iou_loss_diou)(lp, lt, pr))
    ref = _reference(lp, lt, pr)
    # Tolerance slightly relaxed vs 1e-4: EUP approximate reciprocals (a few ULP)
    # replace the exact divides of the reference.
    assert jnp.allclose(loss, ref, rtol=5e-3, atol=5e-3), (loss, ref)

    # Case 2: multi-step grid with a small tile cap — exercises the resident
    # accumulator across the "arbitrary" axis, the full-block fast path, and the
    # tail-gated masked path, while keeping shapes small.
    lp, lt, pr = _make_inputs(3000, k2)
    f = jax.jit(functools.partial(iou_loss_diou, tm_max=8))
    loss = jax.block_until_ready(f(lp, lt, pr))
    ref = _reference(lp, lt, pr)
    assert jnp.allclose(loss, ref, rtol=5e-3, atol=5e-3), (loss, ref)

    print("KERNEL_OK")
</pallas_src>

<mosaic_0001>
module attributes {stable_mosaic.version = 11 : i64} {
  func.func @_iou_loss_diou_kernel(%arg0: i32, %arg1: i32, %arg2: memref<3x4x8x128xf32, #tpu.memory_space<vmem>>, %arg3: memref<1x8x128xf32, #tpu.memory_space<vmem>>) attributes {dimension_semantics = [#tpu.dimension_semantics<parallel>, #tpu.dimension_semantics<arbitrary>], iteration_bounds = array<i64: 1, 1>, scalar_prefetch = 0 : i64, scratch_operands = 0 : i64, tpu.core_type = #tpu.core_type<tc>, window_params = [{transform_indices = @transform_0, window_bounds = array<i64: 3, 4, 8, 128>}, {transform_indices = @transform_1, window_bounds = array<i64: 1, 8, 128>}]} {
    %c0_i32 = arith.constant 0 : i32
    %0 = arith.cmpi eq, %arg1, %c0_i32 : i32
    %1 = arith.extui %0 : i1 to i32
    %c0_i32_0 = arith.constant 0 : i32
    %2 = arith.cmpi ne, %1, %c0_i32_0 : i32
    scf.if %2 {
      %cst_62 = arith.constant 0.000000e+00 : f32
      %113 = vector.broadcast %cst_62 : f32 to vector<1x8x128xf32>
      %c0_63 = arith.constant 0 : index
      %c0_64 = arith.constant 0 : index
      %c0_65 = arith.constant 0 : index
      %114 = vector.load %arg3[%c0_63, %c0_64, %c0_65] : memref<1x8x128xf32, #tpu.memory_space<vmem>>, vector<1x8x128xf32>
      tpu.vector_store %arg3[%c0_63, %c0_64, %c0_65], %113 {strides = array<i32>} : memref<1x8x128xf32, #tpu.memory_space<vmem>>, vector<1x8x128xf32>,
    } else {
    }
    %c0 = arith.constant 0 : index
    %c0_1 = arith.constant 0 : index
    %c0_2 = arith.constant 0 : index
    %c0_3 = arith.constant 0 : index
    %3 = vector.load %arg2[%c0, %c0_1, %c0_2, %c0_3] : memref<3x4x8x128xf32, #tpu.memory_space<vmem>>, vector<1x1x8x128xf32>
    %4 = vector.shape_cast %3 : vector<1x1x8x128xf32> to vector<8x128xf32>
    %c0_4 = arith.constant 0 : index
    %c1 = arith.constant 1 : index
    %c0_5 = arith.constant 0 : index
    %c0_6 = arith.constant 0 : index
    %5 = vector.load %arg2[%c0_4, %c1, %c0_5, %c0_6] : memref<3x4x8x128xf32, #tpu.memory_space<vmem>>, vector<1x1x8x128xf32>
    %6 = vector.shape_cast %5 : vector<1x1x8x128xf32> to vector<8x128xf32>
    %c0_7 = arith.constant 0 : index
    %c2 = arith.constant 2 : index
    %c0_8 = arith.constant 0 : index
    %c0_9 = arith.constant 0 : index
    %7 = vector.load %arg2[%c0_7, %c2, %c0_8, %c0_9] : memref<3x4x8x128xf32, #tpu.memory_space<vmem>>, vector<1x1x8x128xf32>
    %8 = vector.shape_cast %7 : vector<1x1x8x128xf32> to vector<8x128xf32>
    %c0_10 = arith.constant 0 : index
    %c3 = arith.constant 3 : index
    %c0_11 = arith.constant 0 : index
    %c0_12 = arith.constant 0 : index
    %9 = vector.load %arg2[%c0_10, %c3, %c0_11, %c0_12] : memref<3x4x8x128xf32, #tpu.memory_space<vmem>>, vector<1x1x8x128xf32>
    %10 = vector.shape_cast %9 : vector<1x1x8x128xf32> to vector<8x128xf32>
    %c1_13 = arith.constant 1 : index
    %c0_14 = arith.constant 0 : index
    %c0_15 = arith.constant 0 : index
    %c0_16 = arith.constant 0 : index
    %11 = vector.load %arg2[%c1_13, %c0_14, %c0_15, %c0_16] : memref<3x4x8x128xf32, #tpu.memory_space<vmem>>, vector<1x1x8x128xf32>
    %12 = vector.shape_cast %11 : vector<1x1x8x128xf32> to vector<8x128xf32>
    %c1_17 = arith.constant 1 : index
    %c1_18 = arith.constant 1 : index
    %c0_19 = arith.constant 0 : index
    %c0_20 = arith.constant 0 : index
    %13 = vector.load %arg2[%c1_17, %c1_18, %c0_19, %c0_20] : memref<3x4x8x128xf32, #tpu.memory_space<vmem>>, vector<1x1x8x128xf32>
    %14 = vector.shape_cast %13 : vector<1x1x8x128xf32> to vector<8x128xf32>
    %c1_21 = arith.constant 1 : index
    %c2_22 = arith.constant 2 : index
    %c0_23 = arith.constant 0 : index
    %c0_24 = arith.constant 0 : index
    %15 = vector.load %arg2[%c1_21, %c2_22, %c0_23, %c0_24] : memref<3x4x8x128xf32, #tpu.memory_space<vmem>>, vector<1x1x8x128xf32>
    %16 = vector.shape_cast %15 : vector<1x1x8x128xf32> to vector<8x128xf32>
    %c1_25 = arith.constant 1 : index
    %c3_26 = arith.constant 3 : index
    %c0_27 = arith.constant 0 : index
    %c0_28 = arith.constant 0 : index
    %17 = vector.load %arg2[%c1_25, %c3_26, %c0_27, %c0_28] : memref<3x4x8x128xf32, #tpu.memory_space<vmem>>, vector<1x1x8x128xf32>
    %18 = vector.shape_cast %17 : vector<1x1x8x128xf32> to vector<8x128xf32>
    %c2_29 = arith.constant 2 : index
    %c0_30 = arith.constant 0 : index
    %c0_31 = arith.constant 0 : index
    %c0_32 = arith.constant 0 : index
    %19 = vector.load %arg2[%c2_29, %c0_30, %c0_31, %c0_32] : memref<3x4x8x128xf32, #tpu.memory_space<vmem>>, vector<1x1x8x128xf32>
    %20 = vector.shape_cast %19 : vector<1x1x8x128xf32> to vector<8x128xf32>
    %c2_33 = arith.constant 2 : index
    %c1_34 = arith.constant 1 : index
    %c0_35 = arith.constant 0 : index
    %c0_36 = arith.constant 0 : index
    %21 = vector.load %arg2[%c2_33, %c1_34, %c0_35, %c0_36] : memref<3x4x8x128xf32, #tpu.memory_space<vmem>>, vector<1x1x8x128xf32>
    %22 = vector.shape_cast %21 : vector<1x1x8x128xf32> to vector<8x128xf32>
    %c2_37 = arith.constant 2 : index
    %c2_38 = arith.constant 2 : index
    %c0_39 = arith.constant 0 : index
    %c0_40 = arith.constant 0 : index
    %23 = vector.load %arg2[%c2_37, %c2_38, %c0_39, %c0_40] : memref<3x4x8x128xf32, #tpu.memory_space<vmem>>, vector<1x1x8x128xf32>
    %24 = vector.shape_cast %23 : vector<1x1x8x128xf32> to vector<8x128xf32>
    %c2_41 = arith.constant 2 : index
    %c3_42 = arith.constant 3 : index
    %c0_43 = arith.constant 0 : index
    %c0_44 = arith.constant 0 : index
    %25 = vector.load %arg2[%c2_41, %c3_42, %c0_43, %c0_44] : memref<3x4x8x128xf32, #tpu.memory_space<vmem>>, vector<1x1x8x128xf32>
    %26 = vector.shape_cast %25 : vector<1x1x8x128xf32> to vector<8x128xf32>
    %cst = arith.constant 1.000000e-01 : f32
    %27 = vector.broadcast %cst : f32 to vector<8x128xf32>
    %28 = arith.mulf %4, %27 : vector<8x128xf32>
    %29 = arith.mulf %28, %24 : vector<8x128xf32>
    %30 = arith.addf %20, %29 : vector<8x128xf32>
    %cst_45 = arith.constant 1.000000e-01 : f32
    %31 = vector.broadcast %cst_45 : f32 to vector<8x128xf32>
    %32 = arith.mulf %6, %31 : vector<8x128xf32>
    %33 = arith.mulf %32, %26 : vector<8x128xf32>
    %34 = arith.addf %22, %33 : vector<8x128xf32>
    %cst_46 = arith.constant 2.000000e-01 : f32
    %35 = vector.broadcast %cst_46 : f32 to vector<8x128xf32>
    %36 = arith.mulf %8, %35 : vector<8x128xf32>
    %37 = math.exp %36 : vector<8x128xf32>
    %38 = arith.mulf %24, %37 : vector<8x128xf32>
    %cst_47 = arith.constant 2.000000e-01 : f32
    %39 = vector.broadcast %cst_47 : f32 to vector<8x128xf32>
    %40 = arith.mulf %10, %39 : vector<8x128xf32>
    %41 = math.exp %40 : vector<8x128xf32>
    %42 = arith.mulf %26, %41 : vector<8x128xf32>
    %cst_48 = arith.constant 5.000000e-01 : f32
    %43 = vector.broadcast %cst_48 : f32 to vector<8x128xf32>
    %44 = arith.mulf %43, %38 : vector<8x128xf32>
    %45 = arith.subf %30, %44 : vector<8x128xf32>
    %cst_49 = arith.constant 5.000000e-01 : f32
    %46 = vector.broadcast %cst_49 : f32 to vector<8x128xf32>
    %47 = arith.mulf %46, %42 : vector<8x128xf32>
    %48 = arith.subf %34, %47 : vector<8x128xf32>
    %49 = arith.addf %45, %38 : vector<8x128xf32>
    %50 = arith.addf %48, %42 : vector<8x128xf32>
    %51 = arith.subf %16, %12 : vector<8x128xf32>
    %52 = arith.subf %18, %14 : vector<8x128xf32>
    %53 = arith.mulf %38, %42 : vector<8x128xf32>
    %54 = arith.mulf %51, %52 : vector<8x128xf32>
    %55 = arith.addf %12, %16 : vector<8x128xf32>
    %cst_50 = arith.constant 5.000000e-01 : f32
    %56 = vector.broadcast %cst_50 : f32 to vector<8x128xf32>
    %57 = arith.mulf %56, %55 : vector<8x128xf32>
    %58 = arith.addf %14, %18 : vector<8x128xf32>
    %cst_51 = arith.constant 5.000000e-01 : f32
    %59 = vector.broadcast %cst_51 : f32 to vector<8x128xf32>
    %60 = arith.mulf %59, %58 : vector<8x128xf32>
    %61 = arith.minimumf %49, %16 : vector<8x128xf32>
    %62 = arith.maximumf %45, %12 : vector<8x128xf32>
    %63 = arith.subf %61, %62 : vector<8x128xf32>
    %cst_52 = arith.constant 0.000000e+00 : f32
    %64 = vector.broadcast %cst_52 : f32 to vector<8x128xf32>
    %65 = arith.maximumf %63, %64 : vector<8x128xf32>
    %66 = arith.minimumf %50, %18 : vector<8x128xf32>
    %67 = arith.maximumf %48, %14 : vector<8x128xf32>
    %68 = arith.subf %66, %67 : vector<8x128xf32>
    %cst_53 = arith.constant 0.000000e+00 : f32
    %69 = vector.broadcast %cst_53 : f32 to vector<8x128xf32>
    %70 = arith.maximumf %68, %69 : vector<8x128xf32>
    %71 = arith.mulf %65, %70 : vector<8x128xf32>
    %72 = arith.maximumf %49, %16 : vector<8x128xf32>
    %73 = arith.minimumf %45, %12 : vector<8x128xf32>
    %74 = arith.subf %72, %73 : vector<8x128xf32>
    %cst_54 = arith.constant 0.000000e+00 : f32
    %75 = vector.broadcast %cst_54 : f32 to vector<8x128xf32>
    %76 = arith.maximumf %74, %75 : vector<8x128xf32>
    %77 = arith.maximumf %50, %18 : vector<8x128xf32>
    %78 = arith.minimumf %48, %14 : vector<8x128xf32>
    %79 = arith.subf %77, %78 : vector<8x128xf32>
    %cst_55 = arith.constant 0.000000e+00 : f32
    %80 = vector.broadcast %cst_55 : f32 to vector<8x128xf32>
    %81 = arith.maximumf %79, %80 : vector<8x128xf32>
    %82 = arith.subf %57, %30 : vector<8x128xf32>
    %83 = arith.mulf %82, %82 : vector<8x128xf32>
    %84 = arith.subf %60, %34 : vector<8x128xf32>
    %85 = arith.mulf %84, %84 : vector<8x128xf32>
    %86 = arith.addf %83, %85 : vector<8x128xf32>
    %87 = arith.mulf %76, %76 : vector<8x128xf32>
    %88 = arith.mulf %81, %81 : vector<8x128xf32>
    %89 = arith.addf %87, %88 : vector<8x128xf32>
    %90 = arith.addf %53, %54 : vector<8x128xf32>
    %91 = arith.subf %90, %71 : vector<8x128xf32>
    %92 = tpu.reciprocal %91 {approx = true} : vector<8x128xf32> -> vector<8x128xf32>
    %93 = arith.mulf %71, %92 : vector<8x128xf32>
    %94 = tpu.reciprocal %89 {approx = true} : vector<8x128xf32> -> vector<8x128xf32>
    %95 = arith.mulf %86, %94 : vector<8x128xf32>
    %96 = arith.subf %93, %95 : vector<8x128xf32>
    %cst_56 = arith.constant -1.000000e+00 : f32
    %cst_57 = arith.constant 1.000000e+00 : f32
    %97 = vector.broadcast %cst_56 : f32 to vector<8x128xf32>
    %98 = arith.maximumf %97, %96 : vector<8x128xf32>
    %99 = vector.broadcast %cst_57 : f32 to vector<8x128xf32>
    %100 = arith.minimumf %99, %98 : vector<8x128xf32>
    %cst_58 = arith.constant 1.000000e+00 : f32
    %101 = vector.broadcast %cst_58 : f32 to vector<8x128xf32>
    %102 = arith.subf %101, %100 : vector<8x128xf32>
    %c1_i32 = arith.constant 1 : i32
    %103 = arith.muli %arg0, %c1_i32 : i32
    %104 = arith.addi %103, %arg1 : i32
    %c1024_i32 = arith.constant 1024 : i32
    %105 = arith.muli %104, %c1024_i32 : i32
    %c1024_i32_59 = arith.constant 1024 : i32
    %106 = arith.addi %105, %c1024_i32_59 : i32
    %c200_i32 = arith.constant 200 : i32
    %107 = arith.cmpi sle, %106, %c200_i32 : i32
    %108 = arith.extui %107 : i1 to i32
    %c0_i32_60 = arith.constant 0 : i32
    %109 = arith.cmpi ne, %108, %c0_i32_60 : i32
    scf.if %109 {
      %c0_62 = arith.constant 0 : index
      %c0_63 = arith.constant 0 : index
      %c0_64 = arith.constant 0 : index
      %113 = vector.load %arg3[%c0_62, %c0_63, %c0_64] : memref<1x8x128xf32, #tpu.memory_space<vmem>>, vector<1x8x128xf32>
      %114 = vector.shape_cast %102 : vector<8x128xf32> to vector<1x8x128xf32>
      %115 = arith.addf %113, %114 : vector<1x8x128xf32>
      %c0_65 = arith.constant 0 : index
      %c0_66 = arith.constant 0 : index
      %c0_67 = arith.constant 0 : index
      %116 = vector.load %arg3[%c0_65, %c0_66, %c0_67] : memref<1x8x128xf32, #tpu.memory_space<vmem>>, vector<1x8x128xf32>
      tpu.vector_store %arg3[%c0_65, %c0_66, %c0_67], %115 {strides = array<i32>} : memref<1x8x128xf32, #tpu.memory_space<vmem>>, vector<1x8x128xf32>,
    } else {
    }
    %true = arith.constant true
    %110 = arith.xori %107, %true : i1
    %111 = arith.extui %110 : i1 to i32
    %c0_i32_61 = arith.constant 0 : i32
    %112 = arith.cmpi ne, %111, %c0_i32_61 : i32
    scf.if %112 {
      %113 = tpu.iota {dimensions = array<i32: 0>} : vector<8x128xi32>
      %114 = tpu.iota {dimensions = array<i32: 1>} : vector<8x128xi32>
      %c128_i32 = arith.constant 128 : i32
      %115 = vector.broadcast %c128_i32 : i32 to vector<8x128xi32>
      %116 = arith.muli %113, %115 : vector<8x128xi32>
      %117 = vector.broadcast %105 : i32 to vector<8x128xi32>
      %118 = arith.addi %117, %116 : vector<8x128xi32>
      %119 = arith.addi %118, %114 : vector<8x128xi32>
      %c200_i32_62 = arith.constant 200 : i32
      %120 = vector.broadcast %c200_i32_62 : i32 to vector<8x128xi32>
      %121 = arith.cmpi slt, %119, %120 : vector<8x128xi32>
      %c0_63 = arith.constant 0 : index
      %c0_64 = arith.constant 0 : index
      %c0_65 = arith.constant 0 : index
      %122 = vector.load %arg3[%c0_63, %c0_64, %c0_65] : memref<1x8x128xf32, #tpu.memory_space<vmem>>, vector<1x8x128xf32>
      %cst_66 = arith.constant 0.000000e+00 : f32
      %123 = vector.broadcast %cst_66 : f32 to vector<8x128xf32>
      %124 = arith.select %121, %102, %123 : vector<8x128xi1>, vector<8x128xf32>
      %125 = vector.shape_cast %124 : vector<8x128xf32> to vector<1x8x128xf32>
      %126 = arith.addf %122, %125 : vector<1x8x128xf32>
      %c0_67 = arith.constant 0 : index
      %c0_68 = arith.constant 0 : index
      %c0_69 = arith.constant 0 : index
      %127 = vector.load %arg3[%c0_67, %c0_68, %c0_69] : memref<1x8x128xf32, #tpu.memory_space<vmem>>, vector<1x8x128xf32>
      tpu.vector_store %arg3[%c0_67, %c0_68, %c0_69], %126 {strides = array<i32>} : memref<1x8x128xf32, #tpu.memory_space<vmem>>, vector<1x8x128xf32>,
    } else {
    }
    return
  }
  func.func @transform_0(%arg0: i32, %arg1: i32) -> (i32, i32, i32, i32) {
    %c1_i32 = arith.constant 1 : i32
    %0 = arith.muli %arg0, %c1_i32 : i32
    %1 = arith.addi %0, %arg1 : i32
    %c0_i32 = arith.constant 0 : i32
    %c0_i32_0 = arith.constant 0 : i32
    %c0_i32_1 = arith.constant 0 : i32
    %c0_i32_2 = arith.constant 0 : i32
    return %c0_i32, %c0_i32_0, %1, %c0_i32_1 : i32, i32, i32, i32
  }
  func.func @transform_1(%arg0: i32, %arg1: i32) -> (i32, i32, i32) {
    %c0_i32 = arith.constant 0 : i32
    %c0_i32_0 = arith.constant 0 : i32
    %c0_i32_1 = arith.constant 0 : i32
    return %arg0, %c0_i32, %c0_i32_0 : i32, i32, i32
  }
}

</mosaic_0001>

<llo_original>
// kernel: iou_loss_diou.1
$region0: #{iou_loss_diou.1}
  #allocation0 [shape = 'u32[]', space=smem, size = 0x4, offset = 0x4, fixed_abs, tag = 'smem constant byte address 0x4 - core index']
  #allocation1 [shape = 'u32[144,128]{1,0:T(1,128)}', space=vmem, size = 0x12000, scoped, tag = 'internal scratch']
  %s0 = inlined_call_operand.vmem [shape: f32[3,4,8,128], index: 0, kind: input, shape index: {}]
  %s1 = inlined_call_operand.vmem [shape: f32[1,8,128], index: 1, kind: output, shape index: {}]
  %s2 = sld [smem:[#allocation0]]
  $region26: #{iou_loss_diou.1} parent=0
    _
  %s4 = ssub.s32 1, %s2
  %s5 = scalar_select 0, %s4, %s2
  // Predicated region
  $region2: #{iou_loss_diou.1} parent=0 // pred_check
    _
  $region3: #{iou_loss_diou.1} parent=0 // pred_check_branch
    %7 = sbr.rel (0) target = $region5
  $region4: #{iou_loss_diou.1} parent=0 // pred_region
    %s8 = sadd.s32 0, 0
    %p9 = scmp.lt.s32.totalorder %s8, 0
    %s10 = scalar_select %p9, %s8, 0
    %s11 = smul.addr %s10, 8
    %s12 = scalar_lea.vmem %s0, %s11
    %s13 = sadd.s32 0, 0
  $region5: #{iou_loss_diou.1} parent=0 // pred_fallthru
    _
  %s14 = sadd.s32 0, 0
  %p15 = scmp.lt.s32.totalorder %s14, 0
  %s16 = scalar_select %p15, %s14, 0
  %s17 = smul.addr %s16, 8
  %s18 = scalar_lea.vmem %s0, %s17
  %s19 = sadd.s32 0, 0
  %p20 = scmp.lt.s32.totalorder %s19, 0
  %s21 = scalar_select %p20, %s19, 0
  %s22 = smul.addr %s21, 8
  %s23 = scalar_lea.vmem %s0, %s22
  %s24 = sadd.s32 0, 0
  %p25 = scmp.eq.s32.totalorder 0, 0
  // Predicated region
  $region6: #{iou_loss_diou.1} parent=0 // pred_check
    %p26 = pneg %p25
  $region7: #{iou_loss_diou.1} parent=0 // pred_check_branch
    %28 = sbr.rel (%p26) target = $region9
  $region8: #{iou_loss_diou.1} parent=0 // pred_region
    %29 = vst [vmem:[%s1] sm:$0xff] 0.0
  $region9: #{iou_loss_diou.1} parent=0 // pred_fallthru
    _
  %v30 = vld [vmem:[%s23] sm:$0xff]
  %s31 = scalar_lea.vmem %s23, 8
  %v32 = vld [vmem:[%s31] sm:$0xff]
  %s33 = scalar_lea.vmem %s23, 16
  %v34 = vld [vmem:[%s33] sm:$0xff]
  %s35 = scalar_lea.vmem %s23, 24
  %v36 = vld [vmem:[%s35] sm:$0xff]
  %s37 = scalar_lea.vmem %s23, 32
  %v38 = vld [vmem:[%s37] sm:$0xff]
  %s39 = scalar_lea.vmem %s23, 40
  %v40 = vld [vmem:[%s39] sm:$0xff]
  %s41 = scalar_lea.vmem %s23, 48
  %v42 = vld [vmem:[%s41] sm:$0xff]
  %s43 = scalar_lea.vmem %s23, 56
  %v44 = vld [vmem:[%s43] sm:$0xff]
  %s45 = scalar_lea.vmem %s23, 64
  %v46 = vld [vmem:[%s45] sm:$0xff]
  %s47 = scalar_lea.vmem %s23, 72
  %v48 = vld [vmem:[%s47] sm:$0xff]
  %s49 = scalar_lea.vmem %s23, 80
  %v50 = vld [vmem:[%s49] sm:$0xff]
  %s51 = scalar_lea.vmem %s23, 88
  %v52 = vld [vmem:[%s51] sm:$0xff]
  %v53 = vmul.f32 %v30, 0.1
  %v54 = vmul.f32 %v53, %v50
  %v55 = vadd.f32 %v46, %v54
  %v56 = vmul.f32 %v32, 0.1
  %v57 = vmul.f32 %v56, %v52
  %v58 = vadd.f32 %v48, %v57
  %v59 = vmul.f32 %v34, 0.2
  %v60 = vmul.f32 %v59, 1.442695
  %v61 = vpow.pop %v60
  %v62 = vmul.f32 %v50, %v61
  %v63 = vmul.f32 %v36, 0.2
  %v64 = vmul.f32 %v63, 1.442695
  %v65 = vpow.pop %v64
  %v66 = vmul.f32 %v52, %v65
  %v67 = vmul.f32 %v62, 0.5
  %v68 = vsub.f32 %v55, %v67
  %v69 = vmul.f32 %v66, 0.5
  %v70 = vsub.f32 %v58, %v69
  %v71 = vadd.f32 %v68, %v62
  %v72 = vadd.f32 %v70, %v66
  %v73 = vsub.f32 %v42, %v38
  %v74 = vsub.f32 %v44, %v40
  %v75 = vmul.f32 %v62, %v66
  %v76 = vmul.f32 %v73, %v74
  %v77 = vadd.f32 %v38, %v42
  %v78 = vmul.f32 %v77, 0.5
  %v79 = vadd.f32 %v40, %v44
  %v80 = vmul.f32 %v79, 0.5
  %v81 = vmin.f32 %v71, %v42
  %v82 = vmax.f32 %v68, %v38
  %v83 = vsub.f32 %v81, %v82
  %v84 = vmax.f32 %v83, 0.0
  %v85 = vmin.f32 %v72, %v44
  %v86 = vmax.f32 %v70, %v40
  %v87 = vsub.f32 %v85, %v86
  %v88 = vmax.f32 %v87, 0.0
  %v89 = vmul.f32 %v84, %v88
  %v90 = vmax.f32 %v71, %v42
  %v91 = vmin.f32 %v68, %v38
  %v92 = vsub.f32 %v90, %v91
  %v93 = vmax.f32 %v92, 0.0
  %v94 = vmax.f32 %v72, %v44
  %v95 = vmin.f32 %v70, %v40
  %v96 = vsub.f32 %v94, %v95
  %v97 = vmax.f32 %v96, 0.0
  %v98 = vsub.f32 %v78, %v55
  %v99 = vmul.f32 %v98, %v98
  %v100 = vsub.f32 %v80, %v58
  %v101 = vmul.f32 %v100, %v100
  %v102 = vadd.f32 %v99, %v101
  %v103 = vmul.f32 %v93, %v93
  %v104 = vmul.f32 %v97, %v97
  %v105 = vadd.f32 %v103, %v104
  %v106 = vadd.f32 %v75, %v76
  %v107 = vsub.f32 %v106, %v89
  %v108 = vrcp.pop %v107
  %v109 = vmul.f32 %v89, %v108
  %v110 = vrcp.pop %v105
  %v111 = vmul.f32 %v102, %v110
  %v112 = vsub.f32 %v109, %v111
  %v113 = vmax.f32 %v112, -1.0
  %v114 = vmin.f32 %v113, 1.0
  %v115 = vsub.f32 1.0, %v114
  %s116 = sadd.s32 0, 0
  %s117 = smul.u32 %s116, 1024
  %s118 = sadd.s32 %s117, 1024
  %p119 = scmp.le.s32.totalorder %s118, 200
  // Predicated region
  $region10: #{iou_loss_diou.1} parent=0 // pred_check
    %p120 = pneg %p119
  $region11: #{iou_loss_diou.1} parent=0 // pred_check_branch
    %122 = sbr.rel (%p120) target = $region13
  $region12: #{iou_loss_diou.1} parent=0 // pred_region
    %v123 = vld [vmem:[%s1] sm:$0xff]
    %v124 = vadd.f32 %v123, %v115
    %125 = vst [vmem:[%s1] sm:$0xff] %v124
  $region13: #{iou_loss_diou.1} parent=0 // pred_fallthru
    _
  %p126 = scmp.gt.s32.totalorder %s118, 200
  // Predicated region
  $region14: #{iou_loss_diou.1} parent=0 // pred_check
    %p127 = pneg %p126
  $region15: #{iou_loss_diou.1} parent=0 // pred_check_branch
    %129 = sbr.rel (%p127) target = $region17
  $region16: #{iou_loss_diou.1} parent=0 // pred_region
    %v130 = vlaneseq
    %v131 = vshrl.u32 %v130, 7
    %v132 = vlaneseq
    %v133 = vand.u32 %v132, 127
    %v134 = vmul.u32 %v131, 128
    %v135 = vstv %s117
    %v136 = vadd.s32 %v135, %v134
    %v137 = vadd.s32 %v136, %v133
    %vm138 = vcmp.lt.s32.totalorder %v137, 200
    %v139 = vld [vmem:[%s1] sm:$0xff]
    %v140 = vsel %vm138, %v115, 0.0
    %v141 = vadd.f32 %v139, %v140
    %142 = vst [vmem:[%s1] sm:$0xff] %v141
  $region17: #{iou_loss_diou.1} parent=0 // pred_fallthru
    _
  // Predicated region
  $region18: #{iou_loss_diou.1} parent=0 // pred_check
    _
  $region19: #{iou_loss_diou.1} parent=0 // pred_check_branch
    %144 = sbr.rel (0) target = $region21
  $region20: #{iou_loss_diou.1} parent=0 // pred_region
    _
  $region21: #{iou_loss_diou.1} parent=0 // pred_fallthru
    _
  // Predicated region
  $region22: #{iou_loss_diou.1} parent=0 // pred_check
    _
  $region23: #{iou_loss_diou.1} parent=0 // pred_check_branch
    %146 = sbr.rel (0) target = $region25
  $region24: #{iou_loss_diou.1} parent=0 // pred_region
    _
  $region25: #{iou_loss_diou.1} parent=0 // pred_fallthru
    _

</llo_original>
